<compile_context>
chip_gen: v7x
topology: tpu7x:2x2x1
jax: 0.10.0
libtpu: 0.0.40
codegen_flags: <defaults>
</compile_context>

<pallas_src>
import jax
import jax.numpy as jnp
from jax.experimental import pallas as pl
from jax.experimental.pallas import tpu as pltpu

_LANE = 128
_TARGET_STEP_BYTES = 4 * 1024 * 1024    # aim for >= ~4 MiB of X per grid step
_VMEM_SOFT_BUDGET = 24 * 1024 * 1024    # double-buffered tiles stay under this
_VMEM_LIMIT_BYTES = 32 * 1024 * 1024    # scoped VMEM limit handed to Mosaic


def _round_up(x, m):
    return ((x + m - 1) // m) * m


def _cdiv(a, b):
    return -(-a // b)


def _tensorcores_per_chip():
    # v7x packs 2 TensorCores per chip; v5e / v6e have 1.  Splitting the grid
    # on a single-TC chip only adds ~0.35 us per extra step, so gate it.
    try:
        kind = jax.devices()[0].device_kind.lower()
    except Exception:
        return 1
    return 2 if "v7" in kind else 1


def _pick_tile(n_rows, x_row_bytes, out_row_bytes, two_cores):
    """Packed rows per grid step, from real (padded-layout) VMEM math."""
    # Per step: double-buffered X tile (2*tile*x_row_bytes) + double-buffered
    # output slab (2*tile*out_row_bytes); the resident folded weight is tiny.
    cap = _VMEM_SOFT_BUDGET // (2 * (x_row_bytes + out_row_bytes))
    cap = max(_LANE, (cap // _LANE) * _LANE)
    target = max(_LANE, _round_up(_cdiv(_TARGET_STEP_BYTES, x_row_bytes), _LANE))
    tile = min(cap, target, _round_up(n_rows, _LANE))
    if two_cores and n_rows * x_row_bytes >= 4 * 1024 * 1024:
        # v7x only: make the step count even so ("parallel",) balances both
        # TensorCores, but never drop per-step payload below ~2 MiB.
        steps = _cdiv(n_rows, tile)
        if steps % 2 == 1:
            tile = max(_LANE, _round_up(_cdiv(n_rows, steps + 1), _LANE))
    return tile


def net2_kernel(x_ref, v_ref, o_ref):
    # x_ref: (tile, dpack)  lane-dense packed rows of X (p original rows each)
    # v_ref: (vrows, dpack) block-diagonal folded weight (grid-invariant)
    # o_ref: (vrows, tile)  lane-dense output slab: o[j, i] = y[p*i + j]
    #
    # NT contraction on the MXU over the packed 128-lane axis: results land
    # directly on the lane axis (unmasked lane-dense stores), with no
    # cross-lane reduce / sublane->lane relayout.  The MXU slot is otherwise
    # idle in this HBM-bound kernel.
    o_ref[...] = jax.lax.dot_general(
        v_ref[...], x_ref[...],
        dimension_numbers=(((1,), (1,)), ((), ())),
        preferred_element_type=jnp.float32,
    ).astype(o_ref.dtype)


def net2_forward(x, w, x2t, *, tile=None):
    """x: [N, d1], w: [d2, d1] (nn.Linear weight), x2t: [1, d2] -> [N, 1]."""
    N, d1 = x.shape
    itemsize = jnp.dtype(x.dtype).itemsize

    # ---- Fold the two bias-free Linears (wrapper-side, one-time, tiny) ----
    # (X @ W^T) @ X2t^T == X @ (X2t @ W)^T
    v_row = jnp.dot(x2t.astype(jnp.float32), w.astype(jnp.float32),
                    preferred_element_type=jnp.float32)            # [1, d1]

    # ---- Lane-dense packing: view p consecutive rows as one 128-lane row ----
    p = _LANE // d1 if (d1 <= _LANE and _LANE % d1 == 0) else 1
    dpack = p * d1
    n_main = (N // p) * p
    n_packed = n_main // p

    # Block-diagonal folded weight: row j holds v in lanes [j*d1, (j+1)*d1);
    # padded to >= 8 sublanes (extra rows are zero and ignored).
    vrows = _round_up(max(p, 8), 8)
    vblk = jnp.kron(jnp.eye(p, dtype=jnp.float32), v_row)          # [p, dpack]
    if vrows > p:
        vblk = jnp.pad(vblk, ((0, vrows - p), (0, 0)))
    vblk = vblk.astype(x.dtype)

    pieces = []
    if n_packed > 0:
        # Free row-major view (no data movement) of the p-aligned prefix.
        xp = x[:n_main].reshape(n_packed, dpack)
        if tile is None:
            tile = _pick_tile(n_packed, dpack * itemsize, vrows * 4,
                              _tensorcores_per_chip() >= 2)
        num_steps = _cdiv(n_packed, tile)
        # Output allocated tile-aligned (tiny) so every store is in-bounds;
        # the last input block is a clipped DMA (unspecified padding rows) and
        # the corresponding garbage columns are sliced off below.  No copy of
        # X is ever made.
        n_out = num_steps * tile

        out = pl.pallas_call(
            net2_kernel,
            out_shape=jax.ShapeDtypeStruct((vrows, n_out), jnp.float32),
            grid_spec=pltpu.PrefetchScalarGridSpec(
                num_scalar_prefetch=0,
                grid=(num_steps,),
                in_specs=[
                    pl.BlockSpec((tile, dpack), lambda i: (i, 0)),   # X stream
                    pl.BlockSpec((vrows, dpack), lambda i: (0, 0)),  # folded w
                ],
                out_specs=pl.BlockSpec((vrows, tile), lambda i: (0, i)),
            ),
            compiler_params=pltpu.CompilerParams(
                dimension_semantics=("parallel",),
                vmem_limit_bytes=_VMEM_LIMIT_BYTES,
            ),
        )(xp, vblk)

        # De-interleave: out[j, i] = y[p*i + j]  ->  [n_main, 1]  (tiny ops).
        pieces.append(out[:p, :n_packed].T.reshape(n_main, 1))

    if n_main < N:
        # < p leftover rows: one tiny plain-JAX matvec instead of padding /
        # copying the whole batch through HBM again.
        pieces.append(jnp.dot(x[n_main:].astype(jnp.float32), v_row[0])[:, None])

    y = pieces[0] if len(pieces) == 1 else jnp.concatenate(pieces, axis=0)
    return y.astype(x.dtype)


if __name__ == "__main__":
    # Deterministic synthetic parameters / inputs (no checkpoint load).
    d1, d2 = 32, 16

    key = jax.random.PRNGKey(0)
    kx, kw, kx2 = jax.random.split(key, 3)
    # nn.Linear(d1, d2, bias=False).weight has shape [d2, d1]
    w = jax.random.normal(kw, (d2, d1), dtype=jnp.float32) * (1.0 / jnp.sqrt(d1))
    # nn.Linear(d2, 1, bias=False).weight has shape [1, d2]
    x2t = jax.random.normal(kx2, (1, d2), dtype=jnp.float32) * (1.0 / jnp.sqrt(d2))

    fwd = jax.jit(net2_forward)

    # Primary check: N divisible by the pack factor (4) but not by 128,
    # exercising the clipped (ragged) last block without any padding of X.
    N = 200
    x = jax.random.normal(kx, (N, d1), dtype=jnp.float32)
    out = jax.block_until_ready(fwd(x, w, x2t))
    ref = (x @ w.T) @ x2t.T   # folded form only changes summation order (~1e-6)
    assert out.shape == (N, 1)
    assert jnp.allclose(out, ref, atol=1e-4, rtol=1e-4)

    # Secondary check: N not divisible by the pack factor -> plain-JAX tail path.
    N2 = 203
    x2 = jax.random.normal(kx, (N2, d1), dtype=jnp.float32)
    out2 = jax.block_until_ready(fwd(x2, w, x2t))
    ref2 = (x2 @ w.T) @ x2t.T
    assert out2.shape == (N2, 1)
    assert jnp.allclose(out2, ref2, atol=1e-4, rtol=1e-4)

    print("KERNEL_OK")
</pallas_src>

<mosaic_0001>
module attributes {stable_mosaic.version = 11 : i64} {
  func.func @net2_kernel(%arg0: i32, %arg1: memref<128x128xf32, #tpu.memory_space<vmem>>, %arg2: memref<8x128xf32, #tpu.memory_space<vmem>>, %arg3: memref<8x128xf32, #tpu.memory_space<vmem>>) attributes {dimension_semantics = [#tpu.dimension_semantics<parallel>], iteration_bounds = array<i64: 1>, scalar_prefetch = 0 : i64, scratch_operands = 0 : i64, tpu.core_type = #tpu.core_type<tc>, window_params = [{transform_indices = @transform_0, window_bounds = array<i64: 128, 128>}, {pipeline_mode = #tpu.pipeline_mode<synchronous>, transform_indices = @transform_1, window_bounds = array<i64: 8, 128>}, {transform_indices = @transform_2, window_bounds = array<i64: 8, 128>}]} {
    %c0 = arith.constant 0 : index
    %c0_0 = arith.constant 0 : index
    %0 = vector.load %arg2[%c0, %c0_0] : memref<8x128xf32, #tpu.memory_space<vmem>>, vector<8x128xf32>
    %c0_1 = arith.constant 0 : index
    %c0_2 = arith.constant 0 : index
    %1 = vector.load %arg1[%c0_1, %c0_2] : memref<128x128xf32, #tpu.memory_space<vmem>>, vector<128x128xf32>
    %cst = arith.constant dense<0.000000e+00> : vector<8x128xf32>
    %2 = tpu.matmul %0, %1, %cst {dimension_numbers = #tpu.dot_dimension_numbers<[1], [1], [0], [0], [0, 0, 1, 0], [], []>} : vector<8x128xf32>, vector<128x128xf32>, vector<8x128xf32> -> vector<8x128xf32>
    %c0_3 = arith.constant 0 : index
    %c0_4 = arith.constant 0 : index
    %3 = vector.load %arg3[%c0_3, %c0_4] : memref<8x128xf32, #tpu.memory_space<vmem>>, vector<8x128xf32>
    tpu.vector_store %arg3[%c0_3, %c0_4], %2 {strides = array<i32>} : memref<8x128xf32, #tpu.memory_space<vmem>>, vector<8x128xf32>,
    return
  }
  func.func @transform_0(%arg0: i32) -> (i32, i32) {
    %c0_i32 = arith.constant 0 : i32
    %c0_i32_0 = arith.constant 0 : i32
    return %arg0, %c0_i32 : i32, i32
  }
  func.func @transform_1(%arg0: i32) -> (i32, i32) {
    %c0_i32 = arith.constant 0 : i32
    %c0_i32_0 = arith.constant 0 : i32
    %c0_i32_1 = arith.constant 0 : i32
    return %c0_i32, %c0_i32_0 : i32, i32
  }
  func.func @transform_2(%arg0: i32) -> (i32, i32) {
    %c0_i32 = arith.constant 0 : i32
    %c0_i32_0 = arith.constant 0 : i32
    return %c0_i32, %arg0 : i32, i32
  }
}

</mosaic_0001>

<llo_original>
// kernel: net2_forward.1
$region0: #{net2_forward.1}
  #allocation0 [shape = 'u32[]', space=smem, size = 0x4, offset = 0x4, fixed_abs, tag = 'smem constant byte address 0x4 - core index']
  #allocation1 [shape = 'u32[144,128]{1,0:T(1,128)}', space=vmem, size = 0x12000, scoped, tag = 'internal scratch']
  %s0 = inlined_call_operand.vmem [shape: f32[50,128], index: 0, kind: input, shape index: {}]
  %s1 = inlined_call_operand.vmem [shape: f32[8,128], index: 1, kind: input, shape index: {}]
  %s2 = inlined_call_operand.vmem [shape: f32[8,128], index: 2, kind: output, shape index: {}]
  %s3 = sld [smem:[#allocation0]]
  $region18: #{net2_forward.1} parent=0
    _
  %s5 = ssub.s32 1, %s3
  %s6 = scalar_select 0, %s5, %s3
  // Predicated region
  $region2: #{net2_forward.1} parent=0 // pred_check
    _
  $region3: #{net2_forward.1} parent=0 // pred_check_branch
    %8 = sbr.rel (0) target = $region5
  $region4: #{net2_forward.1} parent=0 // pred_region
    _
  $region5: #{net2_forward.1} parent=0 // pred_fallthru
    _
  // Predicated region
  $region6: #{net2_forward.1} parent=0 // pred_check
    _
  $region7: #{net2_forward.1} parent=0 // pred_check_branch
    %10 = sbr.rel (0) target = $region9
  $region8: #{net2_forward.1} parent=0 // pred_region
    _
  $region9: #{net2_forward.1} parent=0 // pred_fallthru
    _
  %v11 = vld [vmem:[%s1] sm:$0xff]
  %v12 = vld [vmem:[%s0] sm:$0xff]
  %v13 = vld [vmem:[%s0 + $0x8] sm:$0xff]
  %v14 = vld [vmem:[%s0 + $0x10] sm:$0xff]
  %v15 = vld [vmem:[%s0 + $0x18] sm:$0xff]
  %v16 = vld [vmem:[%s0 + $0x20] sm:$0xff]
  %v17 = vld [vmem:[%s0 + $0x28] sm:$0xff]
  %v18 = vld [vmem:[%s0 + $0x30] sm:$0xff]
  %v19 = vld [vmem:[%s0 + $0x38] sm:$0xff]
  %v20 = vld [vmem:[%s0 + $0x40] sm:$0xff]
  %v21 = vld [vmem:[%s0 + $0x48] sm:$0xff]
  %v22 = vld [vmem:[%s0 + $0x50] sm:$0xff]
  %v23 = vld [vmem:[%s0 + $0x58] sm:$0xff]
  %v24 = vld [vmem:[%s0 + $0x60] sm:$0xff]
  %v25 = vld [vmem:[%s0 + $0x68] sm:$0xff]
  %v26 = vld [vmem:[%s0 + $0x70] sm:$0xff]
  %v27 = vld [vmem:[%s0 + $0x78] sm:$0xff]
  %28 = vmatprep.subr.mxu0 0.0
  %29 = vmatpush1.xpose.msra.mxu0 %v12
  %30 = vmatprep.subr.mxu0 0.0
  %31 = vmatpush1.xpose.msra.mxu0 %v13
  %32 = vmatprep.subr.mxu0 0.0
  %33 = vmatpush1.xpose.msra.mxu0 %v14
  %34 = vmatprep.subr.mxu0 0.0
  %35 = vmatpush1.xpose.msra.mxu0 %v15
  %36 = vmatprep.subr.mxu0 0.0
  %37 = vmatpush1.xpose.msra.mxu0 %v16
  %38 = vmatprep.subr.mxu0 0.0
  %39 = vmatpush1.xpose.msra.mxu0 %v17
  %40 = vmatprep.subr.mxu0 0.0
  %41 = vmatpush1.xpose.msra.mxu0 %v18
  %42 = vmatprep.subr.mxu0 0.0
  %43 = vmatpush1.xpose.msra.mxu0 %v19
  %44 = vmatprep.subr.mxu0 0.0
  %45 = vmatpush1.xpose.msra.mxu0 %v20
  %46 = vmatprep.subr.mxu0 0.0
  %47 = vmatpush1.xpose.msra.mxu0 %v21
  %48 = vmatprep.subr.mxu0 0.0
  %49 = vmatpush1.xpose.msra.mxu0 %v22
  %50 = vmatprep.subr.mxu0 0.0
  %51 = vmatpush1.xpose.msra.mxu0 %v23
  %52 = vmatprep.subr.mxu0 0.0
  %53 = vmatpush1.xpose.msra.mxu0 %v24
  %54 = vmatprep.subr.mxu0 0.0
  %55 = vmatpush1.xpose.msra.mxu0 %v25
  %56 = vmatprep.subr.mxu0 0.0
  %57 = vmatpush1.xpose.msra.mxu0 %v26
  %58 = vmatprep.subr.mxu0 0.0
  %59 = vmatpush1.xpose.msra.mxu0 %v27
  %60 = vmatprep.subr.mxu0 0.0
  %61 = vmatpush1.xpose.msra.mxu0 0.0
  %62 = vmatprep.subr.mxu0 0.0
  %63 = vmatpush1.xpose.msra.mxu0 0.0
  %64 = vmatprep.subr.mxu0 0.0
  %65 = vmatpush1.xpose.msra.mxu0 0.0
  %66 = vmatprep.subr.mxu0 0.0
  %67 = vmatpush1.xpose.msra.mxu0 0.0
  %68 = vmatprep.subr.mxu0 0.0
  %69 = vmatpush1.xpose.msra.mxu0 0.0
  %70 = vmatprep.subr.mxu0 0.0
  %71 = vmatpush1.xpose.msra.mxu0 0.0
  %72 = vmatprep.subr.mxu0 0.0
  %73 = vmatpush1.xpose.msra.mxu0 0.0
  %74 = vmatprep.subr.mxu0 0.0
  %75 = vmatpush1.xpose.msra.mxu0 0.0
  %76 = vmatprep.subr.mxu0 0.0
  %77 = vmatpush1.xpose.msra.mxu0 0.0
  %78 = vmatprep.subr.mxu0 0.0
  %79 = vmatpush1.xpose.msra.mxu0 0.0
  %80 = vmatprep.subr.mxu0 0.0
  %81 = vmatpush1.xpose.msra.mxu0 0.0
  %82 = vmatprep.subr.mxu0 0.0
  %83 = vmatpush1.xpose.msra.mxu0 0.0
  %84 = vmatprep.subr.mxu0 0.0
  %85 = vmatpush1.xpose.msra.mxu0 0.0
  %86 = vmatprep.subr.mxu0 0.0
  %87 = vmatpush1.xpose.msra.mxu0 0.0
  %88 = vmatprep.subr.mxu0 0.0
  %89 = vmatpush1.xpose.msra.mxu0 0.0
  %90 = vmatprep.subr.mxu0 0.0
  %91 = vmatpush1.xpose.msra.mxu0 0.0
  %92 = vmatprep.mubr.f32.mxu0 0.0
  %93 = vmatmul.mubr.f32.gmra.mrb[0].mxu0 %v11
  %v94 = vpop.f32.mrb[0].mxu0
  %v95 = vadd.f32 0.0, %v94
  %v96 = vpop.f32.mrb[0].mxu0
  %97 = vdwg.mxu0
  %98 = vst [vmem:[%s2] sm:$0xff] %v95
  // Predicated region
  $region10: #{net2_forward.1} parent=0 // pred_check
    _
  $region11: #{net2_forward.1} parent=0 // pred_check_branch
    %100 = sbr.rel (0) target = $region13
  $region12: #{net2_forward.1} parent=0 // pred_region
    _
  $region13: #{net2_forward.1} parent=0 // pred_fallthru
    _
  // Predicated region
  $region14: #{net2_forward.1} parent=0 // pred_check
    _
  $region15: #{net2_forward.1} parent=0 // pred_check_branch
    %102 = sbr.rel (0) target = $region17
  $region16: #{net2_forward.1} parent=0 // pred_region
    _
  $region17: #{net2_forward.1} parent=0 // pred_fallthru
    _

</llo_original>
